<compile_context>
chip_gen: v6e
topology: v6e:2x2x1
jax: 0.10.0
libtpu: 0.0.40
codegen_flags: <defaults>
</compile_context>

<pallas_src>
import math

import jax
import jax.numpy as jnp
from jax.experimental import pallas as pl
from jax.experimental.pallas import tpu as pltpu


def _gated_residual_kernel_2d(w_ref, x_ref, y_ref, o_ref):
    # x_ref/y_ref: (TM, D);  o_ref: (TM, 2*D) with D % 128 == 0.
    w = w_ref[0]
    x = x_ref[...].astype(jnp.float32)
    y = y_ref[...].astype(jnp.float32)
    gate = jax.nn.sigmoid(y * w)
    d = x_ref.shape[-1]
    # Two lane-aligned, unmasked stores; no (TM, 2D) concat intermediate.
    o_ref[:, :d] = (x * (1.0 - gate)).astype(o_ref.dtype)
    o_ref[:, d:] = (y * gate).astype(o_ref.dtype)


def _gated_residual_kernel_3d(w_ref, x_ref, y_ref, o_ref):
    # x_ref/y_ref: (TM, D);  o_ref: (TM, 2, D) — both halves start at lane 0.
    # TODO(synk): for D < 128 the stores stay lane-masked (the vst slot, not
    # HBM, is the binding unit); callers that control D should prefer D % 128 == 0.
    w = w_ref[0]
    x = x_ref[...].astype(jnp.float32)
    y = y_ref[...].astype(jnp.float32)
    gate = jax.nn.sigmoid(y * w)
    o_ref[:, 0, :] = (x * (1.0 - gate)).astype(o_ref.dtype)
    o_ref[:, 1, :] = (y * gate).astype(o_ref.dtype)


def _round_up(v, mult):
    return ((v + mult - 1) // mult) * mult


def _vmem_bytes_per_row(d, itemsize, lane_aligned):
    """Conservative double-buffered VMEM bytes per logical row (x + y + out)."""
    d_pad = _round_up(d, 128)                 # lane padding of each tile row
    in_bytes = 2 * d_pad * itemsize           # x row + y row
    if lane_aligned:
        out_bytes = 2 * d_pad * itemsize      # (TM, 2D) dense plane
    else:
        out_bytes = 8 * d_pad * itemsize      # (TM, 2, D): worst-case sublane pad
    return 2 * (in_bytes + out_bytes)         # x2 for double buffering


def _choose_tm(m, d, itemsize, lane_aligned):
    """Row tile sized from per-TensorCore VMEM with pipelining depth."""
    try:
        vmem_cap = int(pltpu.get_tpu_info().vmem_capacity_bytes)
    except Exception:
        vmem_cap = 64 << 20
    # Treat capacity as per-TensorCore and never assume more than v7x's 64 MiB;
    # larger tiles are past the measured bandwidth plateau anyway.
    vmem_cap = min(vmem_cap, 64 << 20)

    # dtype-native sublane multiple: f32 -> 8, bf16 -> 16, int8/fp8 -> 32.
    sub = max(8, 32 // max(itemsize, 1))

    bytes_per_row = _vmem_bytes_per_row(d, itemsize, lane_aligned)
    budget = int(vmem_cap * 0.40)
    tm = max(sub, min(budget // max(bytes_per_row, 1), 4096))

    # Aim for >= ~8 grid steps (>= 4 per TensorCore on v7x) so the DMA
    # pipeline has depth, while keeping tiles large enough that the ~0.35us
    # per-step overhead stays negligible.
    eight_step = _round_up(pl.cdiv(m, 8), sub)
    tm = min(tm, max(eight_step, min(512, tm)))

    # Prefer large multiples of 256 rows; otherwise round to the sublane mult.
    if tm >= 256:
        tm = (tm // 256) * 256
    else:
        tm = (tm // sub) * sub
    tm = max(sub, min(tm, _round_up(m, sub)))
    return tm, bytes_per_row, sub


def gated_residual(inputs, outputs, weight, *, tm=None):
    """Pallas implementation of GatedResidual.forward."""
    assert inputs.shape == outputs.shape, "inputs/outputs must share a shape"
    *lead, d = inputs.shape
    m = math.prod(lead) if lead else 1
    out_dtype = inputs.dtype

    if m == 0 or d == 0:  # empty input: nothing to launch
        return jnp.zeros((*lead, 2 * d), dtype=out_dtype)

    itemsize = jnp.dtype(inputs.dtype).itemsize
    lane_aligned = (d % 128 == 0)
    auto_tm, bytes_per_row, sub = _choose_tm(m, d, itemsize, lane_aligned)
    if tm is None:
        tm = auto_tm
    tm = max(sub, (int(tm) // sub) * sub)

    grid = pl.cdiv(m, tm)

    x = inputs.reshape(m, d)
    y = outputs.reshape(m, d)
    w = jnp.asarray(weight).reshape((1,)).astype(jnp.float32)

    if lane_aligned:
        kernel = _gated_residual_kernel_2d
        out_shape = jax.ShapeDtypeStruct((m, 2 * d), out_dtype)
        out_spec = pl.BlockSpec((tm, 2 * d), lambda i: (i, 0))
    else:
        kernel = _gated_residual_kernel_3d
        out_shape = jax.ShapeDtypeStruct((m, 2, d), out_dtype)
        out_spec = pl.BlockSpec((tm, 2, d), lambda i: (i, 0, 0))

    # Scoped-VMEM limit: the double-buffered working set plus headroom for
    # compiler-internal scratch, capped well under v7x's 64 MiB per core.
    needed = tm * bytes_per_row
    vmem_limit = int(min(needed + (8 << 20), 48 << 20))
    vmem_limit = max(vmem_limit, 4 << 20)

    out = pl.pallas_call(
        kernel,
        out_shape=out_shape,
        grid=(grid,),
        in_specs=[
            pl.BlockSpec(memory_space=pltpu.MemorySpace.SMEM),  # scalar weight
            pl.BlockSpec((tm, d), lambda i: (i, 0)),            # inputs tile
            pl.BlockSpec((tm, d), lambda i: (i, 0)),            # outputs tile
        ],
        out_specs=out_spec,
        compiler_params=pltpu.CompilerParams(
            dimension_semantics=("parallel",),
            vmem_limit_bytes=vmem_limit,
        ),
        cost_estimate=pl.CostEstimate(
            flops=5 * m * d,
            transcendentals=m * d,
            bytes_accessed=4 * m * d * itemsize,
        ),
    )(w, x, y)

    # Row-major contiguous reshape back to (..., 2*D): free (bitcast) in both
    # the (M, 2D) and (M, 2, D) layouts.
    return out.reshape(*lead, 2 * d)


def _reference(inputs, outputs, weight):
    gate = jax.nn.sigmoid(outputs.astype(jnp.float32) * weight[0])
    left = inputs.astype(jnp.float32) * (1.0 - gate)
    right = outputs.astype(jnp.float32) * gate
    return jnp.concatenate((left, right), axis=-1).astype(inputs.dtype)


if __name__ == "__main__":
    key = jax.random.PRNGKey(0)
    k_w, k_x, k_y = jax.random.split(key, 3)

    batch, seq, hidden = 2, 8, 32
    weight = jax.random.normal(k_w, (1,), dtype=jnp.float32)  # torch.randn(1)
    inputs = jax.random.normal(k_x, (batch, seq, hidden), dtype=jnp.float32)
    outputs = jax.random.normal(k_y, (batch, seq, hidden), dtype=jnp.float32)

    # Unaligned-D path ((M, 2, D) output layout).
    result = jax.block_until_ready(gated_residual(inputs, outputs, weight))
    ref = _reference(inputs, outputs, weight)
    assert result.shape == (batch, seq, 2 * hidden)
    assert jnp.allclose(result, ref, atol=1e-6, rtol=1e-6)

    # Lane-aligned path (D % 128 == 0) with a ragged final row block (M = 15,
    # TM = 8) to exercise the no-pad / masked-last-block behaviour.
    k_x2, k_y2 = jax.random.split(k_x)
    inputs2 = jax.random.normal(k_x2, (3, 5, 128), dtype=jnp.float32)
    outputs2 = jax.random.normal(k_y2, (3, 5, 128), dtype=jnp.float32)
    result2 = jax.block_until_ready(gated_residual(inputs2, outputs2, weight, tm=8))
    ref2 = _reference(inputs2, outputs2, weight)
    assert result2.shape == (3, 5, 256)
    assert jnp.allclose(result2, ref2, atol=1e-6, rtol=1e-6)

    print("KERNEL_OK")
</pallas_src>

<mosaic_0001>
module attributes {stable_mosaic.version = 11 : i64} {
  func.func @_gated_residual_kernel_3d(%arg0: i32, %arg1: memref<1xf32, #tpu.memory_space<smem>>, %arg2: memref<16x32xf32, #tpu.memory_space<vmem>>, %arg3: memref<16x32xf32, #tpu.memory_space<vmem>>, %arg4: memref<16x2x32xf32, #tpu.memory_space<vmem>>) attributes {dimension_semantics = [#tpu.dimension_semantics<parallel>], iteration_bounds = array<i64: 1>, scalar_prefetch = 0 : i64, scratch_operands = 0 : i64, tpu.core_type = #tpu.core_type<tc>, window_params = [{transform_indices = @transform_0, window_bounds = array<i64: 1>}, {transform_indices = @transform_1, window_bounds = array<i64: 16, 32>}, {transform_indices = @transform_2, window_bounds = array<i64: 16, 32>}, {transform_indices = @transform_3, window_bounds = array<i64: 16, 2, 32>}]} {
    %c0 = arith.constant 0 : index
    %0 = memref.load %arg1[%c0] : memref<1xf32, #tpu.memory_space<smem>>
    %c0_0 = arith.constant 0 : index
    %c0_1 = arith.constant 0 : index
    %1 = vector.load %arg2[%c0_0, %c0_1] : memref<16x32xf32, #tpu.memory_space<vmem>>, vector<16x32xf32>
    %c0_2 = arith.constant 0 : index
    %c0_3 = arith.constant 0 : index
    %2 = vector.load %arg3[%c0_2, %c0_3] : memref<16x32xf32, #tpu.memory_space<vmem>>, vector<16x32xf32>
    %3 = vector.broadcast %0 : f32 to vector<16x32xf32>
    %4 = arith.mulf %2, %3 : vector<16x32xf32>
    %5 = arith.negf %4 : vector<16x32xf32>
    %6 = math.exp %5 : vector<16x32xf32>
    %cst = arith.constant 1.000000e+00 : f32
    %7 = vector.broadcast %cst : f32 to vector<16x32xf32>
    %8 = arith.addf %7, %6 : vector<16x32xf32>
    %9 = arith.divf %7, %8 : vector<16x32xf32>
    %cst_4 = arith.constant 1.000000e+00 : f32
    %10 = vector.broadcast %cst_4 : f32 to vector<16x32xf32>
    %11 = arith.subf %10, %9 : vector<16x32xf32>
    %12 = arith.mulf %1, %11 : vector<16x32xf32>
    %c0_5 = arith.constant 0 : index
    %c0_6 = arith.constant 0 : index
    %c0_7 = arith.constant 0 : index
    %13 = vector.load %arg4[%c0_5, %c0_6, %c0_7] : memref<16x2x32xf32, #tpu.memory_space<vmem>>, vector<16x1x32xf32>
    %14 = vector.shape_cast %13 : vector<16x1x32xf32> to vector<16x32xf32>
    %15 = vector.shape_cast %12 : vector<16x32xf32> to vector<16x1x32xf32>
    tpu.vector_store %arg4[%c0_5, %c0_6, %c0_7], %15 {strides = array<i32>} : memref<16x2x32xf32, #tpu.memory_space<vmem>>, vector<16x1x32xf32>,
    %16 = arith.mulf %2, %9 : vector<16x32xf32>
    %c0_8 = arith.constant 0 : index
    %c1 = arith.constant 1 : index
    %c0_9 = arith.constant 0 : index
    %17 = vector.load %arg4[%c0_8, %c1, %c0_9] : memref<16x2x32xf32, #tpu.memory_space<vmem>>, vector<16x1x32xf32>
    %18 = vector.shape_cast %17 : vector<16x1x32xf32> to vector<16x32xf32>
    %19 = vector.shape_cast %16 : vector<16x32xf32> to vector<16x1x32xf32>
    tpu.vector_store %arg4[%c0_8, %c1, %c0_9], %19 {strides = array<i32>} : memref<16x2x32xf32, #tpu.memory_space<vmem>>, vector<16x1x32xf32>,
    return
  }
  func.func @transform_0(%arg0: i32) -> i32 {
    %c0_i32 = arith.constant 0 : i32
    %c0_i32_0 = arith.constant 0 : i32
    return %c0_i32 : i32
  }
  func.func @transform_1(%arg0: i32) -> (i32, i32) {
    %c0_i32 = arith.constant 0 : i32
    %c0_i32_0 = arith.constant 0 : i32
    return %arg0, %c0_i32 : i32, i32
  }
  func.func @transform_2(%arg0: i32) -> (i32, i32) {
    %c0_i32 = arith.constant 0 : i32
    %c0_i32_0 = arith.constant 0 : i32
    return %arg0, %c0_i32 : i32, i32
  }
  func.func @transform_3(%arg0: i32) -> (i32, i32, i32) {
    %c0_i32 = arith.constant 0 : i32
    %c0_i32_0 = arith.constant 0 : i32
    %c0_i32_1 = arith.constant 0 : i32
    return %arg0, %c0_i32, %c0_i32_0 : i32, i32, i32
  }
}

</mosaic_0001>

<llo_original>
// kernel: tpu_custom_call.1
$region0: #{tpu_custom_call.1}
  #allocation0 [shape = 'u32[]', space=smem, size = 0x4, offset = 0x4, fixed_abs, tag = 'smem constant byte address 0x4 - core index']
  #allocation1 [shape = 'u32[144,128]{1,0:T(1,128)}', space=vmem, size = 0x12000, scoped, tag = 'internal scratch']
  #allocation2 [shape = 'f32[1]{0:T(128)S(6)}', space=smem, size = 0x200, scoped, tag = 'scoped memory for tpu_custom_call.1']
  %s0 = inlined_call_operand.<no memory space> [shape: f32[1], index: 0, kind: input, shape index: {}]
  %s1 = inlined_call_operand.hbm [shape: f32[16,32], index: 1, kind: input, shape index: {}]
  %s2 = inlined_call_operand.hbm [shape: f32[16,32], index: 2, kind: input, shape index: {}]
  %s3 = inlined_call_operand.hbm [shape: f32[16,2,32], index: 3, kind: output, shape index: {}]
  %s4 = sld [smem:[#allocation0]]
  $region30: #{tpu_custom_call.1} parent=0
    _
  %s6 = ssub.s32 1, %s4
  %s7 = scalar_select 0, %s6, %s4
  %8 = sst [smem:[#allocation2]] %s0
  $region1: #{tpu_custom_call.1} parent=0
    #allocation3 [shape = 'u8[8192]{0}', space=vmem, size = 0x2000, scoped, tag = 'input window, operand 1, single buffered']
    #allocation4 [shape = 's32[1]{0}', space=sflag, size = 0x4, scoped, tag = 'scoped memory for tpu_custom_call.1']
    #allocation5 [shape = 's32[1]{0}', space=sflag, size = 0x4, scoped, tag = 'scoped memory for tpu_custom_call.1']
    #allocation6 [shape = 'u8[8192]{0}', space=vmem, size = 0x2000, scoped, tag = 'input window, operand 2, single buffered']
    #allocation7 [shape = 's32[1]{0}', space=sflag, size = 0x4, scoped, tag = 'scoped memory for tpu_custom_call.1']
    #allocation8 [shape = 'u8[16384]{0}', space=vmem, size = 0x4000, scoped, tag = 'output window, operand 0, single buffered']
    %9 = vsyncpa [#allocation4], 0
    %10 = vsyncpa [#allocation7], 0
    %11 = vsyncpa [#allocation5], 0
    // Predicated region
    $region2: #{tpu_custom_call.1} parent=1 // pred_check
      _
    $region3: #{tpu_custom_call.1} parent=1 // pred_check_branch
      %13 = sbr.rel (0) target = $region5
    $region4: #{tpu_custom_call.1} parent=1 // pred_region
      _
    $region5: #{tpu_custom_call.1} parent=1 // pred_fallthru
      _
    // Predicated region
    $region6: #{tpu_custom_call.1} parent=1 // pred_check
      _
    $region7: #{tpu_custom_call.1} parent=1 // pred_check_branch
      %15 = sbr.rel (0) target = $region9
    $region8: #{tpu_custom_call.1} parent=1 // pred_region
      %s17 = ssub.s32 256, 256
      %18 = vsyncadd [#allocation4], %s17
      %s19 = sshll.u32 [#allocation3], 4
      %s20 = int_to_ptr.vmem [resolvable:$true] %s19
      %25 = dma.hbm_to_vmem [thread:$0]  %s1, 256, %s20, [#allocation4], 128, 128, 8
    $region9: #{tpu_custom_call.1} parent=1 // pred_fallthru
      _
    // Predicated region
    $region10: #{tpu_custom_call.1} parent=1 // pred_check
      _
    $region11: #{tpu_custom_call.1} parent=1 // pred_check_branch
      %27 = sbr.rel (0) target = $region13
    $region12: #{tpu_custom_call.1} parent=1 // pred_region
      %s29 = ssub.s32 256, 256
      %30 = vsyncadd [#allocation7], %s29
      %s31 = sshll.u32 [#allocation6], 4
      %s32 = int_to_ptr.vmem [resolvable:$true] %s31
      %37 = dma.hbm_to_vmem [thread:$0]  %s2, 256, %s32, [#allocation7], 128, 128, 8
    $region13: #{tpu_custom_call.1} parent=1 // pred_fallthru
      _
    // Predicated region
    $region14: #{tpu_custom_call.1} parent=1 // pred_check
      _
    $region15: #{tpu_custom_call.1} parent=1 // pred_check_branch
      %39 = sbr.rel (0) target = $region17
    $region16: #{tpu_custom_call.1} parent=1 // pred_region
      %40 = dma.done [#allocation4], 256
    $region17: #{tpu_custom_call.1} parent=1 // pred_fallthru
      _
    // Predicated region
    $region18: #{tpu_custom_call.1} parent=1 // pred_check
      _
    $region19: #{tpu_custom_call.1} parent=1 // pred_check_branch
      %42 = sbr.rel (0) target = $region21
    $region20: #{tpu_custom_call.1} parent=1 // pred_region
      %43 = dma.done [#allocation7], 256
    $region21: #{tpu_custom_call.1} parent=1 // pred_fallthru
      _
    %s44 = sld [smem:[#allocation2]]
    %v45 = vld [vmem:[#allocation3] sm:$0xff]
    %v46 = vld [vmem:[#allocation3 + $0x8] sm:$0xff]
    %v47 = vld [vmem:[#allocation6] sm:$0xff]
    %v48 = vld [vmem:[#allocation6 + $0x8] sm:$0xff]
    %v49 = vstv %s44
    %v50 = vmul.f32 %v47, %v49
    %v51 = vmul.f32 %v48, %v49
    %v52 = vxor.u32 %v50, 2147483648
    %v53 = vxor.u32 %v51, 2147483648
    %v54 = vmul.f32 %v52, 1.442695
    %v55 = vpow.pop %v54
    %v56 = vmul.f32 %v53, 1.442695
    %v57 = vpow.pop %v56
    %v58 = vadd.f32 %v55, 1.0
    %v59 = vadd.f32 %v57, 1.0
    %v60 = vrcp.pop %v58
    %v61 = vmul.f32 1.0, %v60
    %v62 = vrcp.pop %v59
    %v63 = vmul.f32 1.0, %v62
    %v64 = vsub.f32 1.0, %v61
    %v65 = vsub.f32 1.0, %v63
    %v66 = vmul.f32 %v45, %v64
    %v67 = vmul.f32 %v46, %v65
    %v70 = vcombine.high %v66, %v66
    %v72 = vunpack.c.l.s4 1966171168
    %v73 = vunpack.c.0.s8 %v72
    %v74 = vlaneseq
    %v75 = vshrl.u32 %v74, 7
    %v76 = vsub.s32 %v73, %v75
    %v77 = vrot.slane %v66, %v76
    %v79 = vunpack.c.l.s4 1966171168
    %v80 = vunpack.c.0.s8 %v79
    %v81 = vlaneseq
    %v82 = vshrl.u32 %v81, 7
    %v83 = vsub.s32 %v80, %v82
    %v84 = vrot.slane %v70, %v83
    %v85 = vcombine.high %v77, %v77
    %v86 = vcombine.high %v84, %v84
    %v88 = vunpack.c.l.s4 1966171168
    %v89 = vunpack.c.0.s8 %v88
    %v90 = vlaneseq
    %v91 = vshrl.u32 %v90, 7
    %v92 = vsub.s32 %v89, %v91
    %v93 = vrot.slane %v77, %v92
    %v95 = vunpack.c.l.s4 1966171168
    %v96 = vunpack.c.0.s8 %v95
    %v97 = vlaneseq
    %v98 = vshrl.u32 %v97, 7
    %v99 = vsub.s32 %v96, %v98
    %v100 = vrot.slane %v84, %v99
    %v102 = vunpack.c.l.s4 1966171168
    %v103 = vunpack.c.0.s8 %v102
    %v104 = vlaneseq
    %v105 = vshrl.u32 %v104, 7
    %v106 = vsub.s32 %v103, %v105
    %v107 = vrot.slane %v85, %v106
    %v109 = vunpack.c.l.s4 1966171168
    %v110 = vunpack.c.0.s8 %v109
    %v111 = vlaneseq
    %v112 = vshrl.u32 %v111, 7
    %v113 = vsub.s32 %v110, %v112
    %v114 = vrot.slane %v86, %v113
    %v115 = vcombine.high %v93, %v93
    %v116 = vcombine.high %v100, %v100
    %v117 = vcombine.high %v107, %v107
    %v118 = vcombine.high %v114, %v114
    %v119 = vcombine.high %v67, %v67
    %v121 = vunpack.c.l.s4 1966171168
    %v122 = vunpack.c.0.s8 %v121
    %v123 = vlaneseq
    %v124 = vshrl.u32 %v123, 7
    %v125 = vsub.s32 %v122, %v124
    %v126 = vrot.slane %v67, %v125
    %v128 = vunpack.c.l.s4 1966171168
    %v129 = vunpack.c.0.s8 %v128
    %v130 = vlaneseq
    %v131 = vshrl.u32 %v130, 7
    %v132 = vsub.s32 %v129, %v131
    %v133 = vrot.slane %v119, %v132
    %v134 = vcombine.high %v126, %v126
    %v135 = vcombine.high %v133, %v133
    %v137 = vunpack.c.l.s4 1966171168
    %v138 = vunpack.c.0.s8 %v137
    %v139 = vlaneseq
    %v140 = vshrl.u32 %v139, 7
    %v141 = vsub.s32 %v138, %v140
    %v142 = vrot.slane %v126, %v141
    %v144 = vunpack.c.l.s4 1966171168
    %v145 = vunpack.c.0.s8 %v144
    %v146 = vlaneseq
    %v147 = vshrl.u32 %v146, 7
    %v148 = vsub.s32 %v145, %v147
    %v149 = vrot.slane %v133, %v148
    %v151 = vunpack.c.l.s4 1966171168
    %v152 = vunpack.c.0.s8 %v151
    %v153 = vlaneseq
    %v154 = vshrl.u32 %v153, 7
    %v155 = vsub.s32 %v152, %v154
    %v156 = vrot.slane %v134, %v155
    %v158 = vunpack.c.l.s4 1966171168
    %v159 = vunpack.c.0.s8 %v158
    %v160 = vlaneseq
    %v161 = vshrl.u32 %v160, 7
    %v162 = vsub.s32 %v159, %v161
    %v163 = vrot.slane %v135, %v162
    %v164 = vcombine.high %v142, %v142
    %v165 = vcombine.high %v149, %v149
    %v166 = vcombine.high %v156, %v156
    %v167 = vcombine.high %v163, %v163
    %vm184 = vcmask 253952
    %185 = vst.msk [vmem:[#allocation8] sm:$0x1] %vm184, %v93
    %186 = vst.msk [vmem:[#allocation8 + $0x2] sm:$0x1] %vm184, %v107
    %187 = vst.msk [vmem:[#allocation8 + $0x4] sm:$0x1] %vm184, %v115
    %188 = vst.msk [vmem:[#allocation8 + $0x6] sm:$0x1] %vm184, %v117
    %189 = vst.msk [vmem:[#allocation8 + $0x8] sm:$0x1] %vm184, %v100
    %190 = vst.msk [vmem:[#allocation8 + $0xa] sm:$0x1] %vm184, %v114
    %191 = vst.msk [vmem:[#allocation8 + $0xc] sm:$0x1] %vm184, %v116
    %192 = vst.msk [vmem:[#allocation8 + $0xe] sm:$0x1] %vm184, %v118
    %193 = vst.msk [vmem:[#allocation8 + $0x10] sm:$0x1] %vm184, %v142
    %194 = vst.msk [vmem:[#allocation8 + $0x12] sm:$0x1] %vm184, %v156
    %195 = vst.msk [vmem:[#allocation8 + $0x14] sm:$0x1] %vm184, %v164
    %196 = vst.msk [vmem:[#allocation8 + $0x16] sm:$0x1] %vm184, %v166
    %197 = vst.msk [vmem:[#allocation8 + $0x18] sm:$0x1] %vm184, %v149
    %198 = vst.msk [vmem:[#allocation8 + $0x1a] sm:$0x1] %vm184, %v163
    %199 = vst.msk [vmem:[#allocation8 + $0x1c] sm:$0x1] %vm184, %v165
    %200 = vst.msk [vmem:[#allocation8 + $0x1e] sm:$0x1] %vm184, %v167
    %v201 = vmul.f32 %v47, %v61
    %v202 = vmul.f32 %v48, %v63
    %v205 = vcombine.high %v201, %v201
    %v207 = vunpack.c.l.s4 1966171168
    %v208 = vunpack.c.0.s8 %v207
    %v209 = vlaneseq
    %v210 = vshrl.u32 %v209, 7
    %v211 = vsub.s32 %v208, %v210
    %v212 = vrot.slane %v201, %v211
    %v214 = vunpack.c.l.s4 1966171168
    %v215 = vunpack.c.0.s8 %v214
    %v216 = vlaneseq
    %v217 = vshrl.u32 %v216, 7
    %v218 = vsub.s32 %v215, %v217
    %v219 = vrot.slane %v205, %v218
    %v220 = vcombine.high %v212, %v212
    %v221 = vcombine.high %v219, %v219
    %v223 = vunpack.c.l.s4 1966171168
    %v224 = vunpack.c.0.s8 %v223
    %v225 = vlaneseq
    %v226 = vshrl.u32 %v225, 7
    %v227 = vsub.s32 %v224, %v226
    %v228 = vrot.slane %v212, %v227
    %v230 = vunpack.c.l.s4 1966171168
    %v231 = vunpack.c.0.s8 %v230
    %v232 = vlaneseq
    %v233 = vshrl.u32 %v232, 7
    %v234 = vsub.s32 %v231, %v233
    %v235 = vrot.slane %v219, %v234
    %v237 = vunpack.c.l.s4 1966171168
    %v238 = vunpack.c.0.s8 %v237
    %v239 = vlaneseq
    %v240 = vshrl.u32 %v239, 7
    %v241 = vsub.s32 %v238, %v240
    %v242 = vrot.slane %v220, %v241
    %v244 = vunpack.c.l.s4 1966171168
    %v245 = vunpack.c.0.s8 %v244
    %v246 = vlaneseq
    %v247 = vshrl.u32 %v246, 7
    %v248 = vsub.s32 %v245, %v247
    %v249 = vrot.slane %v221, %v248
    %v250 = vcombine.high %v228, %v228
    %v251 = vcombine.high %v235, %v235
    %v252 = vcombine.high %v242, %v242
    %v253 = vcombine.high %v249, %v249
    %v254 = vcombine.high %v202, %v202
    %v256 = vunpack.c.l.s4 1966171168
    %v257 = vunpack.c.0.s8 %v256
    %v258 = vlaneseq
    %v259 = vshrl.u32 %v258, 7
    %v260 = vsub.s32 %v257, %v259
    %v261 = vrot.slane %v202, %v260
    %v263 = vunpack.c.l.s4 1966171168
    %v264 = vunpack.c.0.s8 %v263
    %v265 = vlaneseq
    %v266 = vshrl.u32 %v265, 7
    %v267 = vsub.s32 %v264, %v266
    %v268 = vrot.slane %v254, %v267
    %v269 = vcombine.high %v261, %v261
    %v270 = vcombine.high %v268, %v268
    %v272 = vunpack.c.l.s4 1966171168
    %v273 = vunpack.c.0.s8 %v272
    %v274 = vlaneseq
    %v275 = vshrl.u32 %v274, 7
    %v276 = vsub.s32 %v273, %v275
    %v277 = vrot.slane %v261, %v276
    %v279 = vunpack.c.l.s4 1966171168
    %v280 = vunpack.c.0.s8 %v279
    %v281 = vlaneseq
    %v282 = vshrl.u32 %v281, 7
    %v283 = vsub.s32 %v280, %v282
    %v284 = vrot.slane %v268, %v283
    %v286 = vunpack.c.l.s4 1966171168
    %v287 = vunpack.c.0.s8 %v286
    %v288 = vlaneseq
    %v289 = vshrl.u32 %v288, 7
    %v290 = vsub.s32 %v287, %v289
    %v291 = vrot.slane %v269, %v290
    %v293 = vunpack.c.l.s4 1966171168
    %v294 = vunpack.c.0.s8 %v293
    %v295 = vlaneseq
    %v296 = vshrl.u32 %v295, 7
    %v297 = vsub.s32 %v294, %v296
    %v298 = vrot.slane %v270, %v297
    %v299 = vcombine.high %v277, %v277
    %v300 = vcombine.high %v284, %v284
    %v301 = vcombine.high %v291, %v291
    %v302 = vcombine.high %v298, %v298
    %319 = vst.msk [vmem:[#allocation8 + $0x1] sm:$0x1] %vm184, %v228
    %320 = vst.msk [vmem:[#allocation8 + $0x3] sm:$0x1] %vm184, %v242
    %321 = vst.msk [vmem:[#allocation8 + $0x5] sm:$0x1] %vm184, %v250
    %322 = vst.msk [vmem:[#allocation8 + $0x7] sm:$0x1] %vm184, %v252
    %323 = vst.msk [vmem:[#allocation8 + $0x9] sm:$0x1] %vm184, %v235
    %324 = vst.msk [vmem:[#allocation8 + $0xb] sm:$0x1] %vm184, %v249
    %325 = vst.msk [vmem:[#allocation8 + $0xd] sm:$0x1] %vm184, %v251
    %326 = vst.msk [vmem:[#allocation8 + $0xf] sm:$0x1] %vm184, %v253
    %327 = vst.msk [vmem:[#allocation8 + $0x11] sm:$0x1] %vm184, %v277
    %328 = vst.msk [vmem:[#allocation8 + $0x13] sm:$0x1] %vm184, %v291
    %329 = vst.msk [vmem:[#allocation8 + $0x15] sm:$0x1] %vm184, %v299
    %330 = vst.msk [vmem:[#allocation8 + $0x17] sm:$0x1] %vm184, %v301
    %331 = vst.msk [vmem:[#allocation8 + $0x19] sm:$0x1] %vm184, %v284
    %332 = vst.msk [vmem:[#allocation8 + $0x1b] sm:$0x1] %vm184, %v298
    %333 = vst.msk [vmem:[#allocation8 + $0x1d] sm:$0x1] %vm184, %v300
    %334 = vst.msk [vmem:[#allocation8 + $0x1f] sm:$0x1] %vm184, %v302
    // Predicated region
    $region22: #{tpu_custom_call.1} parent=1 // pred_check
      _
    $region23: #{tpu_custom_call.1} parent=1 // pred_check_branch
      %336 = sbr.rel (0) target = $region25
    $region24: #{tpu_custom_call.1} parent=1 // pred_region
      %s338 = ssub.s32 512, 512
      %339 = vsyncadd [#allocation5], %s338
      %s340 = sshll.u32 [#allocation8], 4
      %s341 = int_to_ptr.vmem [resolvable:$true] %s340
      %346 = dma.vmem_to_hbm [thread:$0]  %s341, 512, %s3, [#allocation5], 32, 32, 2
    $region25: #{tpu_custom_call.1} parent=1 // pred_fallthru
      _
    // Predicated region
    $region26: #{tpu_custom_call.1} parent=1 // pred_check
      _
    $region27: #{tpu_custom_call.1} parent=1 // pred_check_branch
      %348 = sbr.rel (0) target = $region29
    $region28: #{tpu_custom_call.1} parent=1 // pred_region
      %349 = dma.done [#allocation5], 512
    $region29: #{tpu_custom_call.1} parent=1 // pred_fallthru
      _
    %350 = vsyncpa [#allocation4], 1
    %351 = vsyncpa [#allocation7], 1
    %352 = vsyncpa [#allocation5], 1

</llo_original>
